<compile_context>
chip_gen: v7x
topology: tpu7x:2x2x1
jax: 0.10.0
libtpu: 0.0.40
codegen_flags: <defaults>
</compile_context>

<pallas_src>
import functools

import jax
import jax.numpy as jnp
from jax import lax
from jax.experimental import pallas as pl
from jax.experimental.pallas import tpu as pltpu


_SQRT_HALF = 0.7071067811865476        # 1/sqrt(2)
_SQRT_2_OVER_PI = 0.7978845608028654   # sqrt(2/pi), for tanh-approx GELU
LANE = 128


def _round_up(x, m):
    return ((x + m - 1) // m) * m


def _gelu_f32(x, approximate):
    # Default (approximate=False) matches PyTorch nn.GELU() exactly (erf).
    if approximate:
        # tanh form: transcendental goes to the otherwise-idle EUP slot.
        return 0.5 * x * (1.0 + jnp.tanh(_SQRT_2_OVER_PI * (x + 0.044715 * x * x * x)))
    return 0.5 * x * (1.0 + lax.erf(x * _SQRT_HALF))


def _make_kernel(approximate):
    def mlp_kernel(x_ref, w1_ref, b1_ref, w2_ref, b2_ref, o_ref):
        # x_ref: (tm, Ep)   w1_ref: (Ep, Hp)  b1_ref: (1, Hp) f32
        # w2_ref: (Hp, Ep)  b2_ref: (1, Ep) f32   o_ref: (tm, Ep)
        x = x_ref[...]
        h = jnp.dot(x, w1_ref[...], preferred_element_type=jnp.float32)
        h = h + b1_ref[...]                 # f32 bias into f32 accumulator
        h = _gelu_f32(h, approximate)       # activation in f32
        y = jnp.dot(h.astype(w2_ref.dtype), w2_ref[...],
                    preferred_element_type=jnp.float32)
        y = y + b2_ref[...]
        o_ref[...] = y.astype(o_ref.dtype)
    return mlp_kernel


def _vmem_capacity_bytes():
    """Per-core VMEM capacity; conservative (v7x) fallback if the query fails."""
    try:
        cap = int(pltpu.get_tpu_info().vmem_capacity_bytes)
        if cap > 0:
            return cap
    except Exception:
        pass
    return 64 * 1024 * 1024


def _pick_row_tile(M, Ep, Hp, in_bytes, out_bytes, tm_req, budget):
    """Largest row tile <= tm_req fitting the chip-aware VMEM budget, capped so
    the row grid has >= 2 steps (megacore sharding on v7x)."""
    min_rows = 8 if in_bytes >= 4 else (16 if in_bytes == 2 else 32)

    # Weights/biases are single-buffered (pl.Buffered(1)) -> no 2x factor.
    const_bytes = (Ep * Hp + Hp * Ep) * in_bytes + (Hp + Ep) * 4

    def usage(t):
        x_tile = 2 * t * Ep * in_bytes       # double-buffered x stream
        o_tile = 2 * t * Ep * out_bytes      # double-buffered output stream
        h_live = t * Hp * 4                  # f32 hidden intermediate
        return const_bytes + x_tile + o_tile + h_live

    tm = max(min_rows, _round_up(min(tm_req, _round_up(M, min_rows)), min_rows))
    while tm > min_rows and usage(tm) > budget:
        tm = max(min_rows, _round_up(tm // 2, min_rows))
    # Guarantee >= 2 grid steps when there are at least two minimum tiles of
    # rows, so dimension_semantics=("parallel",) shards across both v7x TCs.
    if M >= 2 * min_rows:
        tm = min(tm, max(min_rows, _round_up((M + 1) // 2, min_rows)))
    return tm, usage(tm)


def _prep_params(w1, b1, w2, b2, cdt):
    """Pad weights/biases to lane-aligned shapes and cast once (exact: padded
    rows/cols are zero and padded output columns are sliced off)."""
    E, H = w1.shape
    Ep, Hp = _round_up(E, LANE), _round_up(H, LANE)
    w1p = w1.astype(cdt)
    w2p = w2.astype(cdt)
    if (Ep, Hp) != (E, H):
        w1p = jnp.pad(w1p, ((0, Ep - E), (0, Hp - H)))
        w2p = jnp.pad(w2p, ((0, Hp - H), (0, Ep - E)))
    b1p = b1.astype(jnp.float32)
    b2p = b2.astype(jnp.float32)
    if Hp != H:
        b1p = jnp.pad(b1p, ((0, Hp - H),))
    if Ep != E:
        b2p = jnp.pad(b2p, ((0, Ep - E),))
    return w1p, b1p.reshape(1, Hp), w2p, b2p.reshape(1, Ep)


def _mlp_core(x2d, w1p, b1p, w2p, b2p, *, out_dtype, tm_eff, gelu_approximate):
    Mp, Ep = x2d.shape
    Hp = w1p.shape[1]
    in_bytes = jnp.dtype(x2d.dtype).itemsize
    out_bytes = jnp.dtype(out_dtype).itemsize

    cap = _vmem_capacity_bytes()
    limit_cap = int(cap * 0.9)
    usage = ((Ep * Hp + Hp * Ep) * in_bytes + (Hp + Ep) * 4
             + 2 * tm_eff * Ep * (in_bytes + out_bytes) + tm_eff * Hp * 4)
    # Always set the scoped-VMEM limit explicitly: v5e defaults to ~16 MiB and
    # v6e to ~32 MiB, either of which can be below the working set.
    vmem_limit = int(min(limit_cap, max(usage * 5 // 4, 32 * 1024 * 1024)))

    # Advisory cost from the padded dims actually processed.
    cost = pl.CostEstimate(
        flops=4 * Mp * Ep * Hp,
        transcendentals=Mp * Hp,
        bytes_accessed=(Mp * Ep + Ep * Hp + Hp * Ep) * in_bytes
                       + (Hp + Ep) * 4 + Mp * Ep * out_bytes,
    )

    const = pl.Buffered(1)   # single-buffer the VMEM-resident constant operands
    grid = (Mp // tm_eff,)

    return pl.pallas_call(
        _make_kernel(gelu_approximate),
        out_shape=jax.ShapeDtypeStruct((Mp, Ep), out_dtype),
        grid_spec=pltpu.PrefetchScalarGridSpec(
            num_scalar_prefetch=0,
            grid=grid,
            in_specs=[
                pl.BlockSpec((tm_eff, Ep), lambda i: (i, 0)),                 # x rows
                pl.BlockSpec((Ep, Hp), lambda i: (0, 0), pipeline_mode=const),  # W1
                pl.BlockSpec((1, Hp), lambda i: (0, 0), pipeline_mode=const),   # b1
                pl.BlockSpec((Hp, Ep), lambda i: (0, 0), pipeline_mode=const),  # W2
                pl.BlockSpec((1, Ep), lambda i: (0, 0), pipeline_mode=const),   # b2
            ],
            out_specs=pl.BlockSpec((tm_eff, Ep), lambda i: (i, 0)),           # lane-dense
        ),
        compiler_params=pltpu.CompilerParams(
            dimension_semantics=("parallel",),   # rows shard across v7x's 2 TCs
            vmem_limit_bytes=vmem_limit,
        ),
        cost_estimate=cost,
    )(x2d, w1p, b1p, w2p, b2p)


def _pad_x(x2d, M, E, Mp, Ep):
    if (Mp, Ep) == (M, E):
        return x2d
    return jnp.pad(x2d, ((0, Mp - M), (0, Ep - E)))


@functools.partial(jax.jit,
                   static_argnames=("tm", "compute_dtype", "gelu_approximate"))
def mlp_pallas(x, w1, b1, w2, b2, *, tm=512, compute_dtype=None,
               gelu_approximate=False):
    """One-shot convenience wrapper (pads/casts params per call under jit).
    Use make_mlp() when the same parameters are applied repeatedly."""
    B, S, E = x.shape
    H = w1.shape[1]
    M = B * S
    out_dtype = x.dtype
    cdt = jnp.dtype(compute_dtype) if compute_dtype is not None else x.dtype

    Ep, Hp = _round_up(E, LANE), _round_up(H, LANE)
    in_bytes = jnp.dtype(cdt).itemsize
    out_bytes = jnp.dtype(out_dtype).itemsize

    budget = int(_vmem_capacity_bytes() * 0.7)
    tm_eff, _ = _pick_row_tile(M, Ep, Hp, in_bytes, out_bytes, tm, budget)
    Mp = _round_up(M, tm_eff)

    x2d = _pad_x(x.reshape(M, E).astype(cdt), M, E, Mp, Ep)
    w1p, b1p, w2p, b2p = _prep_params(w1, b1, w2, b2, cdt)

    out = _mlp_core(x2d, w1p, b1p, w2p, b2p, out_dtype=out_dtype,
                    tm_eff=tm_eff, gelu_approximate=gelu_approximate)
    return out[:M, :E].reshape(B, S, E)


def make_mlp(w1, b1, w2, b2, *, tm=512, compute_dtype=None,
             gelu_approximate=False):
    """Pad/cast the parameters once (eagerly) and return a jitted apply(x),
    removing per-call weight pad/cast HBM traffic from the hot path."""
    E, H = w1.shape
    cdt = (jnp.dtype(compute_dtype) if compute_dtype is not None
           else jnp.dtype(w1.dtype))
    w1p, b1p, w2p, b2p = map(jax.block_until_ready,
                             _prep_params(w1, b1, w2, b2, cdt))
    Ep, Hp = _round_up(E, LANE), _round_up(H, LANE)

    @jax.jit
    def apply(x):
        B, S, E_in = x.shape
        assert E_in == E, "embedding size mismatch"
        M = B * S
        out_dtype = x.dtype
        in_bytes = jnp.dtype(cdt).itemsize
        out_bytes = jnp.dtype(out_dtype).itemsize
        budget = int(_vmem_capacity_bytes() * 0.7)
        tm_eff, _ = _pick_row_tile(M, Ep, Hp, in_bytes, out_bytes, tm, budget)
        Mp = _round_up(M, tm_eff)
        x2d = _pad_x(x.reshape(M, E).astype(cdt), M, E, Mp, Ep)
        out = _mlp_core(x2d, w1p, b1p, w2p, b2p, out_dtype=out_dtype,
                        tm_eff=tm_eff, gelu_approximate=gelu_approximate)
        return out[:M, :E].reshape(B, S, E)

    return apply


def mlp_reference(x, w1, b1, w2, b2):
    h = jnp.dot(x, w1) + b1
    h = 0.5 * h * (1.0 + lax.erf(h * _SQRT_HALF))
    return jnp.dot(h, w2) + b2


if __name__ == "__main__":
    # Small shapes consistent with the module: tokens [B, S, E], emb_size=32.
    B, S, E = 2, 8, 32
    H = 4 * E  # 128

    key = jax.random.PRNGKey(0)
    kx, kw1, kb1, kw2, kb2 = jax.random.split(key, 5)

    x = jax.random.normal(kx, (B, S, E), dtype=jnp.float32)
    # Deterministic param init (roughly like PyTorch Linear's uniform scale).
    w1 = jax.random.uniform(kw1, (E, H), minval=-1.0, maxval=1.0) / jnp.sqrt(1.0 * E)
    b1 = jax.random.uniform(kb1, (H,), minval=-1.0, maxval=1.0) / jnp.sqrt(1.0 * E)
    w2 = jax.random.uniform(kw2, (H, E), minval=-1.0, maxval=1.0) / jnp.sqrt(1.0 * H)
    b2 = jax.random.uniform(kb2, (E,), minval=-1.0, maxval=1.0) / jnp.sqrt(1.0 * H)

    y_ref = mlp_reference(x, w1, b1, w2, b2)

    # f32 one-shot path: exact GELU, matches PyTorch nn.GELU() semantics.
    y = jax.block_until_ready(mlp_pallas(x, w1, b1, w2, b2))
    assert y.shape == (B, S, E)
    assert jnp.allclose(y, y_ref, atol=1e-5, rtol=1e-5), "f32 mismatch vs reference"

    # bf16-operand path (f32 accumulation, f32 biases) — MXU-friendly mode.
    y_bf16 = jax.block_until_ready(
        mlp_pallas(x, w1, b1, w2, b2, compute_dtype=jnp.bfloat16))
    assert y_bf16.shape == (B, S, E)
    assert jnp.allclose(y_bf16, y_ref, atol=5e-2, rtol=5e-2), "bf16 mismatch vs reference"

    # Factory path: parameters padded/cast once, reused across calls.
    mlp_fn = make_mlp(w1, b1, w2, b2)
    y_fac = jax.block_until_ready(mlp_fn(x))
    assert jnp.allclose(y_fac, y_ref, atol=1e-5, rtol=1e-5), "factory mismatch vs reference"

    print("KERNEL_OK")
</pallas_src>

<mosaic_0001>
module attributes {stable_mosaic.version = 11 : i64} {
  func.func @mlp_kernel(%arg0: i32, %arg1: memref<8x128xf32, #tpu.memory_space<vmem>>, %arg2: memref<128x128xf32, #tpu.memory_space<vmem>>, %arg3: memref<1x128xf32, #tpu.memory_space<vmem>>, %arg4: memref<128x128xf32, #tpu.memory_space<vmem>>, %arg5: memref<1x128xf32, #tpu.memory_space<vmem>>, %arg6: memref<8x128xf32, #tpu.memory_space<vmem>>) attributes {dimension_semantics = [#tpu.dimension_semantics<parallel>], iteration_bounds = array<i64: 2>, scalar_prefetch = 0 : i64, scratch_operands = 0 : i64, tpu.core_type = #tpu.core_type<tc>, window_params = [{transform_indices = @transform_0, window_bounds = array<i64: 8, 128>}, {pipeline_mode = #tpu.pipeline_mode<synchronous>, transform_indices = @transform_1, window_bounds = array<i64: 128, 128>}, {pipeline_mode = #tpu.pipeline_mode<synchronous>, transform_indices = @transform_2, window_bounds = array<i64: 1, 128>}, {pipeline_mode = #tpu.pipeline_mode<synchronous>, transform_indices = @transform_3, window_bounds = array<i64: 128, 128>}, {pipeline_mode = #tpu.pipeline_mode<synchronous>, transform_indices = @transform_4, window_bounds = array<i64: 1, 128>}, {transform_indices = @transform_5, window_bounds = array<i64: 8, 128>}]} {
    %c0 = arith.constant 0 : index
    %c0_0 = arith.constant 0 : index
    %0 = vector.load %arg1[%c0, %c0_0] : memref<8x128xf32, #tpu.memory_space<vmem>>, vector<8x128xf32>
    %c0_1 = arith.constant 0 : index
    %c0_2 = arith.constant 0 : index
    %1 = vector.load %arg2[%c0_1, %c0_2] : memref<128x128xf32, #tpu.memory_space<vmem>>, vector<128x128xf32>
    %cst = arith.constant dense<0.000000e+00> : vector<8x128xf32>
    %2 = tpu.matmul %0, %1, %cst {dimension_numbers = #tpu.dot_dimension_numbers<[1], [0], [0], [1], [0, 0, 1, 1], [], []>} : vector<8x128xf32>, vector<128x128xf32>, vector<8x128xf32> -> vector<8x128xf32>
    %c0_3 = arith.constant 0 : index
    %c0_4 = arith.constant 0 : index
    %3 = vector.load %arg3[%c0_3, %c0_4] : memref<1x128xf32, #tpu.memory_space<vmem>>, vector<1x128xf32>
    %4 = vector.broadcast %3 : vector<1x128xf32> to vector<8x128xf32>
    %5 = arith.addf %2, %4 : vector<8x128xf32>
    %cst_5 = arith.constant 5.000000e-01 : f32
    %6 = vector.broadcast %cst_5 : f32 to vector<8x128xf32>
    %7 = arith.mulf %6, %5 : vector<8x128xf32>
    %cst_6 = arith.constant 0.707106769 : f32
    %8 = vector.broadcast %cst_6 : f32 to vector<8x128xf32>
    %9 = arith.mulf %5, %8 : vector<8x128xf32>
    %10 = math.erf %9 : vector<8x128xf32>
    %cst_7 = arith.constant 1.000000e+00 : f32
    %11 = vector.broadcast %cst_7 : f32 to vector<8x128xf32>
    %12 = arith.addf %11, %10 : vector<8x128xf32>
    %13 = arith.mulf %7, %12 : vector<8x128xf32>
    %c0_8 = arith.constant 0 : index
    %c0_9 = arith.constant 0 : index
    %14 = vector.load %arg4[%c0_8, %c0_9] : memref<128x128xf32, #tpu.memory_space<vmem>>, vector<128x128xf32>
    %cst_10 = arith.constant dense<0.000000e+00> : vector<8x128xf32>
    %15 = tpu.matmul %13, %14, %cst_10 {dimension_numbers = #tpu.dot_dimension_numbers<[1], [0], [0], [1], [0, 0, 1, 1], [], []>} : vector<8x128xf32>, vector<128x128xf32>, vector<8x128xf32> -> vector<8x128xf32>
    %c0_11 = arith.constant 0 : index
    %c0_12 = arith.constant 0 : index
    %16 = vector.load %arg5[%c0_11, %c0_12] : memref<1x128xf32, #tpu.memory_space<vmem>>, vector<1x128xf32>
    %17 = vector.broadcast %16 : vector<1x128xf32> to vector<8x128xf32>
    %18 = arith.addf %15, %17 : vector<8x128xf32>
    %c0_13 = arith.constant 0 : index
    %c0_14 = arith.constant 0 : index
    %19 = vector.load %arg6[%c0_13, %c0_14] : memref<8x128xf32, #tpu.memory_space<vmem>>, vector<8x128xf32>
    tpu.vector_store %arg6[%c0_13, %c0_14], %18 {strides = array<i32>} : memref<8x128xf32, #tpu.memory_space<vmem>>, vector<8x128xf32>,
    return
  }
  func.func @transform_0(%arg0: i32) -> (i32, i32) {
    %c0_i32 = arith.constant 0 : i32
    %c0_i32_0 = arith.constant 0 : i32
    return %arg0, %c0_i32 : i32, i32
  }
  func.func @transform_1(%arg0: i32) -> (i32, i32) {
    %c0_i32 = arith.constant 0 : i32
    %c0_i32_0 = arith.constant 0 : i32
    %c0_i32_1 = arith.constant 0 : i32
    return %c0_i32, %c0_i32_0 : i32, i32
  }
  func.func @transform_2(%arg0: i32) -> (i32, i32) {
    %c0_i32 = arith.constant 0 : i32
    %c0_i32_0 = arith.constant 0 : i32
    %c0_i32_1 = arith.constant 0 : i32
    return %c0_i32, %c0_i32_0 : i32, i32
  }
  func.func @transform_3(%arg0: i32) -> (i32, i32) {
    %c0_i32 = arith.constant 0 : i32
    %c0_i32_0 = arith.constant 0 : i32
    %c0_i32_1 = arith.constant 0 : i32
    return %c0_i32, %c0_i32_0 : i32, i32
  }
  func.func @transform_4(%arg0: i32) -> (i32, i32) {
    %c0_i32 = arith.constant 0 : i32
    %c0_i32_0 = arith.constant 0 : i32
    %c0_i32_1 = arith.constant 0 : i32
    return %c0_i32, %c0_i32_0 : i32, i32
  }
  func.func @transform_5(%arg0: i32) -> (i32, i32) {
    %c0_i32 = arith.constant 0 : i32
    %c0_i32_0 = arith.constant 0 : i32
    return %arg0, %c0_i32 : i32, i32
  }
}

</mosaic_0001>

<llo_original>
// kernel: mlp_pallas.1
$region0: #{mlp_pallas.1}
  #allocation0 [shape = 'u32[]', space=smem, size = 0x4, offset = 0x4, fixed_abs, tag = 'smem constant byte address 0x4 - core index']
  #allocation1 [shape = 'u32[144,128]{1,0:T(1,128)}', space=vmem, size = 0x12000, scoped, tag = 'internal scratch']
  %s0 = inlined_call_operand.vmem [shape: f32[16,128], index: 0, kind: input, shape index: {}]
  %s1 = inlined_call_operand.vmem [shape: f32[128,128], index: 1, kind: input, shape index: {}]
  %s2 = inlined_call_operand.vmem [shape: f32[1,128], index: 2, kind: input, shape index: {}]
  %s3 = inlined_call_operand.vmem [shape: f32[128,128], index: 3, kind: input, shape index: {}]
  %s4 = inlined_call_operand.vmem [shape: f32[1,128], index: 4, kind: input, shape index: {}]
  %s5 = inlined_call_operand.vmem [shape: f32[16,128], index: 5, kind: output, shape index: {}]
  %s6 = sld [smem:[#allocation0]]
  $region53: #{mlp_pallas.1} parent=0
    _
  %s8 = ssub.s32 1, %s6
  %s9 = scalar_select 0, %s8, %s6
  loop: start=0, step=1, limit=4
  $region2: #{mlp_pallas.1} parent=0 // loop_pre_header
    _
  $region3: #{mlp_pallas.1} parent=0 // loop_header
    %s11 = sphi 0, %s15
    %p12 = scmp.ge.s32.totalorder %s11, 4
    %s21 = sphi 0, %s23
    %s24 = sphi 0, %s21
    %s25 = sphi 0, %s24
    %s41 = sphi 0, %s25
    %s45 = sphi 0, %s45
    %s47 = sphi 0, %s45
    %s48 = sphi 0, %s47
    %s62 = sphi 0, %s48
    %s66 = sphi 0, %s66
    %s68 = sphi 0, %s66
    %s69 = sphi 0, %s68
    %s83 = sphi 0, %s69
    %s87 = sphi 0, %s87
    %s89 = sphi 0, %s87
    %s90 = sphi 0, %s89
    %s104 = sphi 0, %s90
    %s108 = sphi 0, %s108
    %s110 = sphi 0, %s108
    %s111 = sphi 0, %s110
    %s125 = sphi 0, %s111
    %s131 = sphi 0, %s133
    %s134 = sphi 0, %s131
    %s135 = sphi 0, %s134
    %s151 = sphi 0, %s135
  $region4: #{mlp_pallas.1} parent=0 // loop_header_branch
    %14 = sbr.rel (%p12) target = $region8
  $region5: #{mlp_pallas.1} parent=0 // loop_body
    %s16 = ssub.s32 %s11, 1
    %s17 = ssub.s32 %s11, 2
    %s18 = sadd.s32 %s11, 1
    %s19 = ssub.s32 %s11, %s18
    %p20 = scmp.eq.s32.totalorder %s19, 0
    %s22 = sadd.s32 %s21, 1
    %s23 = scalar_select %p20, %s21, %s22
    %p26 = pneg %p20
    %p27 = scmp.eq.s32.totalorder %s11, 1
    %p28 = por %p26, %p27
    %p29 = scmp.ne.s32.totalorder %s21, %s24
    %p30 = scmp.eq.s32.totalorder %s11, 0
    %p31 = por %p29, %p30
    %p32 = scmp.ne.s32.totalorder %s21, %s24
    %p33 = scmp.eq.s32.totalorder %s16, 1
    %p34 = por %p32, %p33
    %p35 = scmp.ne.s32.totalorder %s24, %s25
    %p36 = scmp.eq.s32.totalorder %s16, 0
    %p37 = por %p35, %p36
    %p38 = scmp.ne.s32.totalorder %s24, %s25
    %p39 = scmp.eq.s32.totalorder %s17, 1
    %p40 = por %p38, %p39
    %p42 = scmp.ne.s32.totalorder %s25, %s41
    %p43 = scmp.eq.s32.totalorder %s17, 0
    %p44 = por %p42, %p43
    %s46 = sadd.s32 %s45, 1
    %p49 = scmp.eq.s32.totalorder %s11, 1
    %p50 = scmp.ne.s32.totalorder %s45, %s47
    %p51 = scmp.eq.s32.totalorder %s11, 0
    %p52 = por %p50, %p51
    %p53 = scmp.ne.s32.totalorder %s45, %s47
    %p54 = scmp.eq.s32.totalorder %s16, 1
    %p55 = por %p53, %p54
    %p56 = scmp.ne.s32.totalorder %s47, %s48
    %p57 = scmp.eq.s32.totalorder %s16, 0
    %p58 = por %p56, %p57
    %p59 = scmp.ne.s32.totalorder %s47, %s48
    %p60 = scmp.eq.s32.totalorder %s17, 1
    %p61 = por %p59, %p60
    %p63 = scmp.ne.s32.totalorder %s48, %s62
    %p64 = scmp.eq.s32.totalorder %s17, 0
    %p65 = por %p63, %p64
    %s67 = sadd.s32 %s66, 1
    %p70 = scmp.eq.s32.totalorder %s11, 1
    %p71 = scmp.ne.s32.totalorder %s66, %s68
    %p72 = scmp.eq.s32.totalorder %s11, 0
    %p73 = por %p71, %p72
    %p74 = scmp.ne.s32.totalorder %s66, %s68
    %p75 = scmp.eq.s32.totalorder %s16, 1
    %p76 = por %p74, %p75
    %p77 = scmp.ne.s32.totalorder %s68, %s69
    %p78 = scmp.eq.s32.totalorder %s16, 0
    %p79 = por %p77, %p78
    %p80 = scmp.ne.s32.totalorder %s68, %s69
    %p81 = scmp.eq.s32.totalorder %s17, 1
    %p82 = por %p80, %p81
    %p84 = scmp.ne.s32.totalorder %s69, %s83
    %p85 = scmp.eq.s32.totalorder %s17, 0
    %p86 = por %p84, %p85
    %s88 = sadd.s32 %s87, 1
    %p91 = scmp.eq.s32.totalorder %s11, 1
    %p92 = scmp.ne.s32.totalorder %s87, %s89
    %p93 = scmp.eq.s32.totalorder %s11, 0
    %p94 = por %p92, %p93
    %p95 = scmp.ne.s32.totalorder %s87, %s89
    %p96 = scmp.eq.s32.totalorder %s16, 1
    %p97 = por %p95, %p96
    %p98 = scmp.ne.s32.totalorder %s89, %s90
    %p99 = scmp.eq.s32.totalorder %s16, 0
    %p100 = por %p98, %p99
    %p101 = scmp.ne.s32.totalorder %s89, %s90
    %p102 = scmp.eq.s32.totalorder %s17, 1
    %p103 = por %p101, %p102
    %p105 = scmp.ne.s32.totalorder %s90, %s104
    %p106 = scmp.eq.s32.totalorder %s17, 0
    %p107 = por %p105, %p106
    %s109 = sadd.s32 %s108, 1
    %p112 = scmp.eq.s32.totalorder %s11, 1
    %p113 = scmp.ne.s32.totalorder %s108, %s110
    %p114 = scmp.eq.s32.totalorder %s11, 0
    %p115 = por %p113, %p114
    %p116 = scmp.ne.s32.totalorder %s108, %s110
    %p117 = scmp.eq.s32.totalorder %s16, 1
    %p118 = por %p116, %p117
    %p119 = scmp.ne.s32.totalorder %s110, %s111
    %p120 = scmp.eq.s32.totalorder %s16, 0
    %p121 = por %p119, %p120
    %p122 = scmp.ne.s32.totalorder %s110, %s111
    %p123 = scmp.eq.s32.totalorder %s17, 1
    %p124 = por %p122, %p123
    %p126 = scmp.ne.s32.totalorder %s111, %s125
    %p127 = scmp.eq.s32.totalorder %s17, 0
    %p128 = por %p126, %p127
    %s129 = ssub.s32 %s11, %s18
    %p130 = scmp.eq.s32.totalorder %s129, 0
    %s132 = sadd.s32 %s131, 1
    %s133 = scalar_select %p130, %s131, %s132
    %p136 = pneg %p130
    %p137 = scmp.eq.s32.totalorder %s11, 1
    %p138 = por %p136, %p137
    %p139 = scmp.ne.s32.totalorder %s131, %s134
    %p140 = scmp.eq.s32.totalorder %s11, 0
    %p141 = por %p139, %p140
    %p142 = scmp.ne.s32.totalorder %s131, %s134
    %p143 = scmp.eq.s32.totalorder %s16, 1
    %p144 = por %p142, %p143
    %p145 = scmp.ne.s32.totalorder %s134, %s135
    %p146 = scmp.eq.s32.totalorder %s16, 0
    %p147 = por %p145, %p146
    %p148 = scmp.ne.s32.totalorder %s134, %s135
    %p149 = scmp.eq.s32.totalorder %s17, 1
    %p150 = por %p148, %p149
    %p152 = scmp.ne.s32.totalorder %s135, %s151
    %p153 = scmp.eq.s32.totalorder %s17, 0
    %p154 = por %p152, %p153
    %p155 = scmp.le.s32.totalorder 1, %s11
    %p156 = scmp.lt.s32.totalorder %s11, 3
    %p157 = pnand %p155, %p156
    %p158 = pneg %p157
    // Predicated region
    $region9: #{mlp_pallas.1} parent=5 // pred_check
      _
    $region10: #{mlp_pallas.1} parent=5 // pred_check_branch
      %160 = sbr.rel (%p157) target = $region12
    $region11: #{mlp_pallas.1} parent=5 // pred_region
      %s161 = ssub.s32 %s11, 1
      // Predicated region
      $region13: #{mlp_pallas.1} parent=11 // pred_check
        %p162 = pneg %p58
      $region14: #{mlp_pallas.1} parent=11 // pred_check_branch
        %164 = sbr.rel (%p162) target = $region16
      $region15: #{mlp_pallas.1} parent=11 // pred_region
        _
      $region16: #{mlp_pallas.1} parent=11 // pred_fallthru
        _
      // Predicated region
      $region17: #{mlp_pallas.1} parent=11 // pred_check
        %p165 = pneg %p79
      $region18: #{mlp_pallas.1} parent=11 // pred_check_branch
        %167 = sbr.rel (%p165) target = $region20
      $region19: #{mlp_pallas.1} parent=11 // pred_region
        _
      $region20: #{mlp_pallas.1} parent=11 // pred_fallthru
        _
      // Predicated region
      $region21: #{mlp_pallas.1} parent=11 // pred_check
        %p168 = pneg %p100
      $region22: #{mlp_pallas.1} parent=11 // pred_check_branch
        %170 = sbr.rel (%p168) target = $region24
      $region23: #{mlp_pallas.1} parent=11 // pred_region
        _
      $region24: #{mlp_pallas.1} parent=11 // pred_fallthru
        _
      // Predicated region
      $region25: #{mlp_pallas.1} parent=11 // pred_check
        %p171 = pneg %p121
      $region26: #{mlp_pallas.1} parent=11 // pred_check_branch
        %173 = sbr.rel (%p171) target = $region28
      $region27: #{mlp_pallas.1} parent=11 // pred_region
        _
      $region28: #{mlp_pallas.1} parent=11 // pred_fallthru
        _
    $region12: #{mlp_pallas.1} parent=5 // pred_fallthru
      _
    %p174 = scmp.lt.s32.totalorder %s11, 2
    // Predicated region
    $region29: #{mlp_pallas.1} parent=5 // pred_check
      %p175 = pneg %p174
    $region30: #{mlp_pallas.1} parent=5 // pred_check_branch
      %177 = sbr.rel (%p175) target = $region32
    $region31: #{mlp_pallas.1} parent=5 // pred_region
      // Predicated region
      $region33: #{mlp_pallas.1} parent=31 // pred_check
        %p178 = pneg %p31
      $region34: #{mlp_pallas.1} parent=31 // pred_check_branch
        %180 = sbr.rel (%p178) target = $region36
      $region35: #{mlp_pallas.1} parent=31 // pred_region
        %p181 = scmp.lt.s32.totalorder %s11, 1
        %s182 = scalar_select %p181, %s11, 1
        %s183 = smul.addr %s182, 8
        %s184 = scalar_lea.vmem %s0, %s183
      $region36: #{mlp_pallas.1} parent=31 // pred_fallthru
        _
    $region32: #{mlp_pallas.1} parent=5 // pred_fallthru
      _
    %p185 = scmp.le.s32.totalorder 1, %s11
    %p186 = scmp.lt.s32.totalorder %s11, 3
    %p187 = pnand %p185, %p186
    %p188 = pneg %p187
    // Predicated region
    $region37: #{mlp_pallas.1} parent=5 // pred_check
      _
    $region38: #{mlp_pallas.1} parent=5 // pred_check_branch
      %190 = sbr.rel (%p187) target = $region40
    $region39: #{mlp_pallas.1} parent=5 // pred_region
      %s191 = ssub.s32 %s11, 1
      %p192 = scmp.lt.s32.totalorder %s16, 1
      %s193 = scalar_select %p192, %s16, 1
      %s194 = smul.addr %s193, 8
      %s195 = scalar_lea.vmem %s0, %s194
      %p196 = pneg %p37
      %p197 = pneg %p34
      %p198 = pneg %p58
      %p199 = pneg %p55
      %p200 = pneg %p79
      %p201 = pneg %p76
      %p202 = pneg %p100
      %p203 = pneg %p97
      %p204 = pneg %p121
      %p205 = pneg %p118
      %p206 = pneg %p147
      %p207 = pneg %p144
      %p208 = scmp.lt.s32.totalorder %s16, 1
      %s209 = scalar_select %p208, %s16, 1
      %s210 = smul.addr %s209, 8
      %s211 = scalar_lea.vmem %s5, %s210
      %p212 = scmp.lt.s32.totalorder %s16, 1
      %s213 = scalar_select %p212, %s16, 1
      %s214 = smul.addr %s213, 8
      %s215 = scalar_lea.vmem %s0, %s214
      %p216 = scmp.lt.s32.totalorder %s16, 1
      %s217 = scalar_select %p216, %s16, 1
      %s218 = smul.addr %s217, 8
      %s219 = scalar_lea.vmem %s5, %s218
      %v220 = vld [vmem:[%s215] sm:$0xff]
      %v221 = vld [vmem:[%s1] sm:$0xff]
      %v222 = vld [vmem:[%s1 + $0x8] sm:$0xff]
      %v223 = vld [vmem:[%s1 + $0x10] sm:$0xff]
      %v224 = vld [vmem:[%s1 + $0x18] sm:$0xff]
      %v225 = vld [vmem:[%s1 + $0x20] sm:$0xff]
      %v226 = vld [vmem:[%s1 + $0x28] sm:$0xff]
      %v227 = vld [vmem:[%s1 + $0x30] sm:$0xff]
      %v228 = vld [vmem:[%s1 + $0x38] sm:$0xff]
      %v229 = vld [vmem:[%s1 + $0x40] sm:$0xff]
      %v230 = vld [vmem:[%s1 + $0x48] sm:$0xff]
      %v231 = vld [vmem:[%s1 + $0x50] sm:$0xff]
      %v232 = vld [vmem:[%s1 + $0x58] sm:$0xff]
      %v233 = vld [vmem:[%s1 + $0x60] sm:$0xff]
      %v234 = vld [vmem:[%s1 + $0x68] sm:$0xff]
      %v235 = vld [vmem:[%s1 + $0x70] sm:$0xff]
      %v236 = vld [vmem:[%s1 + $0x78] sm:$0xff]
      %v237 = vld [vmem:[%s2] sm:$0x1]
      %v239 = vlaneseq
      %v240 = vshrl.u32 %v239, 7
      %v241 = vsub.s32 0, %v240
      %v242 = vrot.slane %v237, %v241
      %244 = vmatprep.subr.mxu0 0.0
      %245 = vmatpush1.msra.mxu0 %v221
      %246 = vmatprep.subr.mxu0 0.0
      %247 = vmatpush1.msra.mxu0 %v222
      %248 = vmatprep.subr.mxu0 0.0
      %249 = vmatpush1.msra.mxu0 %v223
      %250 = vmatprep.subr.mxu0 0.0
      %251 = vmatpush1.msra.mxu0 %v224
      %252 = vmatprep.subr.mxu0 0.0
      %253 = vmatpush1.msra.mxu0 %v225
      %254 = vmatprep.subr.mxu0 0.0
      %255 = vmatpush1.msra.mxu0 %v226
      %256 = vmatprep.subr.mxu0 0.0
      %257 = vmatpush1.msra.mxu0 %v227
      %258 = vmatprep.subr.mxu0 0.0
      %259 = vmatpush1.msra.mxu0 %v228
      %260 = vmatprep.subr.mxu0 0.0
      %261 = vmatpush1.msra.mxu0 %v229
      %262 = vmatprep.subr.mxu0 0.0
      %263 = vmatpush1.msra.mxu0 %v230
      %264 = vmatprep.subr.mxu0 0.0
      %265 = vmatpush1.msra.mxu0 %v231
      %266 = vmatprep.subr.mxu0 0.0
      %267 = vmatpush1.msra.mxu0 %v232
      %268 = vmatprep.subr.mxu0 0.0
      %269 = vmatpush1.msra.mxu0 %v233
      %270 = vmatprep.subr.mxu0 0.0
      %271 = vmatpush1.msra.mxu0 %v234
      %272 = vmatprep.subr.mxu0 0.0
      %273 = vmatpush1.msra.mxu0 %v235
      %274 = vmatprep.subr.mxu0 0.0
      %275 = vmatpush1.msra.mxu0 %v236
      %276 = vmatprep.subr.mxu0 0.0
      %277 = vmatpush1.msra.mxu0 0.0
      %278 = vmatprep.subr.mxu0 0.0
      %279 = vmatpush1.msra.mxu0 0.0
      %280 = vmatprep.subr.mxu0 0.0
      %281 = vmatpush1.msra.mxu0 0.0
      %282 = vmatprep.subr.mxu0 0.0
      %283 = vmatpush1.msra.mxu0 0.0
      %284 = vmatprep.subr.mxu0 0.0
      %285 = vmatpush1.msra.mxu0 0.0
      %286 = vmatprep.subr.mxu0 0.0
      %287 = vmatpush1.msra.mxu0 0.0
      %288 = vmatprep.subr.mxu0 0.0
      %289 = vmatpush1.msra.mxu0 0.0
      %290 = vmatprep.subr.mxu0 0.0
      %291 = vmatpush1.msra.mxu0 0.0
      %292 = vmatprep.subr.mxu0 0.0
      %293 = vmatpush1.msra.mxu0 0.0
      %294 = vmatprep.subr.mxu0 0.0
      %295 = vmatpush1.msra.mxu0 0.0
      %296 = vmatprep.subr.mxu0 0.0
      %297 = vmatpush1.msra.mxu0 0.0
      %298 = vmatprep.subr.mxu0 0.0
      %299 = vmatpush1.msra.mxu0 0.0
      %300 = vmatprep.subr.mxu0 0.0
      %301 = vmatpush1.msra.mxu0 0.0
      %302 = vmatprep.subr.mxu0 0.0
      %303 = vmatpush1.msra.mxu0 0.0
      %304 = vmatprep.subr.mxu0 0.0
      %305 = vmatpush1.msra.mxu0 0.0
      %306 = vmatprep.subr.mxu0 0.0
      %307 = vmatpush1.msra.mxu0 0.0
      %308 = vmatprep.mubr.f32.mxu0 0.0
      %309 = vmatmul.mubr.f32.gmra.mrb[0].mxu0 %v220
      %v310 = vpop.f32.mrb[0].mxu0
      %v311 = vadd.f32 %v242, %v310
      %v312 = vpop.f32.mrb[0].mxu0
      %313 = vdwg.mxu0
      %v314 = vmul.f32 %v311, 0.5
      %v315 = vmul.f32 %v311, 0.70710677
      %v316 = verf.f32.pop %v315
      %v317 = vadd.f32 %v316, 1.0
      %v318 = vmul.f32 %v314, %v317
      %v319 = vld [vmem:[%s3] sm:$0xff]
      %v320 = vld [vmem:[%s3 + $0x8] sm:$0xff]
      %v321 = vld [vmem:[%s3 + $0x10] sm:$0xff]
      %v322 = vld [vmem:[%s3 + $0x18] sm:$0xff]
      %v323 = vld [vmem:[%s3 + $0x20] sm:$0xff]
      %v324 = vld [vmem:[%s3 + $0x28] sm:$0xff]
      %v325 = vld [vmem:[%s3 + $0x30] sm:$0xff]
      %v326 = vld [vmem:[%s3 + $0x38] sm:$0xff]
      %v327 = vld [vmem:[%s3 + $0x40] sm:$0xff]
      %v328 = vld [vmem:[%s3 + $0x48] sm:$0xff]
      %v329 = vld [vmem:[%s3 + $0x50] sm:$0xff]
      %v330 = vld [vmem:[%s3 + $0x58] sm:$0xff]
      %v331 = vld [vmem:[%s3 + $0x60] sm:$0xff]
      %v332 = vld [vmem:[%s3 + $0x68] sm:$0xff]
      %v333 = vld [vmem:[%s3 + $0x70] sm:$0xff]
      %v334 = vld [vmem:[%s3 + $0x78] sm:$0xff]
      %v335 = vld [vmem:[%s4] sm:$0x1]
      %v337 = vlaneseq
      %v338 = vshrl.u32 %v337, 7
      %v339 = vsub.s32 0, %v338
      %v340 = vrot.slane %v335, %v339
      %342 = vmatprep.subr.mxu0 0.0
      %343 = vmatpush1.msra.mxu0 %v319
      %344 = vmatprep.subr.mxu0 0.0
      %345 = vmatpush1.msra.mxu0 %v320
      %346 = vmatprep.subr.mxu0 0.0
      %347 = vmatpush1.msra.mxu0 %v321
      %348 = vmatprep.subr.mxu0 0.0
      %349 = vmatpush1.msra.mxu0 %v322
      %350 = vmatprep.subr.mxu0 0.0
      %351 = vmatpush1.msra.mxu0 %v323
      %352 = vmatprep.subr.mxu0 0.0
      %353 = vmatpush1.msra.mxu0 %v324
      %354 = vmatprep.subr.mxu0 0.0
      %355 = vmatpush1.msra.mxu0 %v325
      %356 = vmatprep.subr.mxu0 0.0
      %357 = vmatpush1.msra.mxu0 %v326
      %358 = vmatprep.subr.mxu0 0.0
      %359 = vmatpush1.msra.mxu0 %v327
      %360 = vmatprep.subr.mxu0 0.0
      %361 = vmatpush1.msra.mxu0 %v328
      %362 = vmatprep.subr.mxu0 0.0
      %363 = vmatpush1.msra.mxu0 %v329
      %364 = vmatprep.subr.mxu0 0.0
      %365 = vmatpush1.msra.mxu0 %v330
      %366 = vmatprep.subr.mxu0 0.0
      %367 = vmatpush1.msra.mxu0 %v331
      %368 = vmatprep.subr.mxu0 0.0
      %369 = vmatpush1.msra.mxu0 %v332
      %370 = vmatprep.subr.mxu0 0.0
      %371 = vmatpush1.msra.mxu0 %v333
      %372 = vmatprep.subr.mxu0 0.0
      %373 = vmatpush1.msra.mxu0 %v334
      %374 = vmatprep.subr.mxu0 0.0
      %375 = vmatpush1.msra.mxu0 0.0
      %376 = vmatprep.subr.mxu0 0.0
      %377 = vmatpush1.msra.mxu0 0.0
      %378 = vmatprep.subr.mxu0 0.0
      %379 = vmatpush1.msra.mxu0 0.0
      %380 = vmatprep.subr.mxu0 0.0
      %381 = vmatpush1.msra.mxu0 0.0
      %382 = vmatprep.subr.mxu0 0.0
      %383 = vmatpush1.msra.mxu0 0.0
      %384 = vmatprep.subr.mxu0 0.0
      %385 = vmatpush1.msra.mxu0 0.0
      %386 = vmatprep.subr.mxu0 0.0
      %387 = vmatpush1.msra.mxu0 0.0
      %388 = vmatprep.subr.mxu0 0.0
      %389 = vmatpush1.msra.mxu0 0.0
      %390 = vmatprep.subr.mxu0 0.0
      %391 = vmatpush1.msra.mxu0 0.0
      %392 = vmatprep.subr.mxu0 0.0
      %393 = vmatpush1.msra.mxu0 0.0
      %394 = vmatprep.subr.mxu0 0.0
      %395 = vmatpush1.msra.mxu0 0.0
      %396 = vmatprep.subr.mxu0 0.0
      %397 = vmatpush1.msra.mxu0 0.0
      %398 = vmatprep.subr.mxu0 0.0
      %399 = vmatpush1.msra.mxu0 0.0
      %400 = vmatprep.subr.mxu0 0.0
      %401 = vmatpush1.msra.mxu0 0.0
      %402 = vmatprep.subr.mxu0 0.0
      %403 = vmatpush1.msra.mxu0 0.0
      %404 = vmatprep.subr.mxu0 0.0
      %405 = vmatpush1.msra.mxu0 0.0
      %406 = vmatprep.mubr.f32.mxu0 0.0
      %407 = vmatmul.mubr.f32.gmra.mrb[0].mxu0 %v318
      %v408 = vpop.f32.mrb[0].mxu0
      %v409 = vadd.f32 %v340, %v408
      %v410 = vpop.f32.mrb[0].mxu0
      %411 = vdwg.mxu0
      %412 = vst [vmem:[%s219] sm:$0xff] %v409
      %p413 = scmp.lt.s32.totalorder %s16, 1
      %s414 = scalar_select %p413, %s16, 1
      %s415 = smul.addr %s414, 8
      %s416 = scalar_lea.vmem %s5, %s415
      // Predicated region
      $region41: #{mlp_pallas.1} parent=39 // pred_check
        %p417 = pneg %p144
      $region42: #{mlp_pallas.1} parent=39 // pred_check_branch
        %419 = sbr.rel (%p417) target = $region44
      $region43: #{mlp_pallas.1} parent=39 // pred_region
        _
      $region44: #{mlp_pallas.1} parent=39 // pred_fallthru
        _
    $region40: #{mlp_pallas.1} parent=5 // pred_fallthru
      _
    %p420 = scmp.le.s32.totalorder 2, %s11
    // Predicated region
    $region45: #{mlp_pallas.1} parent=5 // pred_check
      %p421 = pneg %p420
    $region46: #{mlp_pallas.1} parent=5 // pred_check_branch
      %423 = sbr.rel (%p421) target = $region48
    $region47: #{mlp_pallas.1} parent=5 // pred_region
      %s424 = ssub.s32 %s11, 2
      // Predicated region
      $region49: #{mlp_pallas.1} parent=47 // pred_check
        %p425 = pneg %p150
      $region50: #{mlp_pallas.1} parent=47 // pred_check_branch
        %427 = sbr.rel (%p425) target = $region52
      $region51: #{mlp_pallas.1} parent=47 // pred_region
        %p428 = scmp.lt.s32.totalorder %s17, 1
        %s429 = scalar_select %p428, %s17, 1
        %s430 = smul.addr %s429, 8
        %s431 = scalar_lea.vmem %s5, %s430
      $region52: #{mlp_pallas.1} parent=47 // pred_fallthru
        _
    $region48: #{mlp_pallas.1} parent=5 // pred_fallthru
      _
  $region6: #{mlp_pallas.1} parent=0 // loop_footer
    %s15 = sadd.s32 1, %s11
  $region7: #{mlp_pallas.1} parent=0 // loop_footer_branch
    %10 = sbr.rel target = $region3
  $region8: #{mlp_pallas.1} parent=0 // loop_exit
    _

</llo_original>
